<compile_context>
chip_gen: v5e
topology: v5e:2x2
jax: 0.10.0
libtpu: 0.0.40
codegen_flags: <defaults>
</compile_context>

<pallas_src>
import functools
import jax
import jax.numpy as jnp
from jax.experimental import pallas as pl
from jax.experimental.pallas import tpu as pltpu

BN_EPS = 1e-5
_VMEM_LIMIT = 32 * 1024 * 1024  # raises v5e's 16 MiB scoped default; safe on v6e/v7x


def _round_up(x, m):
    return (x + m - 1) // m * m


def _cphys(c):
    # physical (lane-dense) channel count carried between layers
    return max(128, _round_up(c, 128))


# ---------------------------------------------------------------------------
# Pallas kernels
# ---------------------------------------------------------------------------
def _mm_bias_kernel(x_ref, w_ref, b_ref, o_ref, *, apply_relu):
    # (tm, K) bf16 @ (K, tn) bf16 -> f32 on the MXU; bias (+ReLU) epilogue in f32.
    acc = jnp.dot(x_ref[...], w_ref[...], preferred_element_type=jnp.float32)
    y = acc + b_ref[...]
    if apply_relu:
        y = jnp.maximum(y, 0.0)
    o_ref[...] = y.astype(o_ref.dtype)


def _conv3x3_kernel(x_ref, w_ref, b_ref, o_ref, *, taps, Ho, Wo, apply_relu):
    # x_ref: (1, Ht, Ws, Cin) padded input slab (parity-stacked for stride 2),
    # w_ref: (9, Cin, Cout) bf16 with BN scale folded in, b_ref: (1, Cout) f32.
    cin = x_ref.shape[-1]
    acc = None
    for t, (ro, co) in enumerate(taps):
        slab = x_ref[0, ro:ro + Ho, co:co + Wo, :].reshape(Ho * Wo, cin)
        part = jnp.dot(slab, w_ref[t], preferred_element_type=jnp.float32)
        acc = part if acc is None else acc + part
    y = acc + b_ref[...]
    if apply_relu:
        y = jnp.maximum(y, 0.0)
    o_ref[...] = y.reshape(1, Ho, Wo, -1).astype(o_ref.dtype)


def _conv3x3_res_kernel(x_ref, w_ref, b_ref, r_ref, o_ref, *, taps, Ho, Wo,
                        apply_relu):
    # Same as above plus fused residual add (residual arrives in bf16).
    cin = x_ref.shape[-1]
    acc = None
    for t, (ro, co) in enumerate(taps):
        slab = x_ref[0, ro:ro + Ho, co:co + Wo, :].reshape(Ho * Wo, cin)
        part = jnp.dot(slab, w_ref[t], preferred_element_type=jnp.float32)
        acc = part if acc is None else acc + part
    res = r_ref[...].reshape(Ho * Wo, -1).astype(jnp.float32)
    y = acc + b_ref[...] + res
    if apply_relu:
        y = jnp.maximum(y, 0.0)
    o_ref[...] = y.reshape(1, Ho, Wo, -1).astype(o_ref.dtype)


def _maxpool3x3_kernel(x_ref, o_ref, *, taps, Ho, Wo):
    # 3x3/s2/p1 max-pool: 9 static slab slices, 8 elementwise VPU maxes.
    acc = None
    for (ro, co) in taps:
        slab = x_ref[0, ro:ro + Ho, co:co + Wo, :]
        acc = slab if acc is None else jnp.maximum(acc, slab)
    o_ref[...] = acc[None]


def _avgpool_fc_kernel(x_ref, w_ref, b_ref, o_ref):
    # Global average pool (spatial axis) fused with the fc layer.
    pooled = jnp.mean(x_ref[...].astype(jnp.float32), axis=1)          # (N, C)
    o_ref[...] = jnp.dot(pooled, w_ref[...],
                         preferred_element_type=jnp.float32) + b_ref[...]


# ---------------------------------------------------------------------------
# Tiling helpers
# ---------------------------------------------------------------------------
def _choose_m_tiles(M):
    # One full tile for small M (pad to 16 for clean bf16 sublane packing);
    # 512-row tiles otherwise (per-step VMEM stays ~8-10 MB, fine on all gens).
    if M <= 512:
        Mp = _round_up(M, 16)
        return Mp, Mp
    tm = 512
    return _round_up(M, tm), tm


def _choose_c_tiles(C):
    if C <= 128:
        return C, C
    Cp = _round_up(C, 128)
    tn = 256 if Cp % 256 == 0 else 128
    return Cp, tn


# ---------------------------------------------------------------------------
# Generic matmul wrapper (stem conv / 1x1 downsample convs)
# ---------------------------------------------------------------------------
def matmul_bias_act(x, w, bias, apply_relu):
    """out = act(x @ w + bias); x (M,K), w (K,C) -> (M,C) bf16."""
    M, K = x.shape
    K2, C = w.shape
    assert K == K2
    Mp, tm = _choose_m_tiles(M)
    Cp, tn = _choose_c_tiles(C)

    xp = x.astype(jnp.bfloat16)
    if Mp != M:
        xp = jnp.pad(xp, ((0, Mp - M), (0, 0)))
    wp = w.astype(jnp.bfloat16)
    if Cp != C:
        wp = jnp.pad(wp, ((0, 0), (0, Cp - C)))
    b2 = bias.reshape(1, C).astype(jnp.float32)
    if Cp != C:
        b2 = jnp.pad(b2, ((0, 0), (0, Cp - C)))

    # C outermost so the (K, tn) weight tile is DMAed once per C tile.
    grid = (Cp // tn, Mp // tm)
    out = pl.pallas_call(
        functools.partial(_mm_bias_kernel, apply_relu=apply_relu),
        out_shape=jax.ShapeDtypeStruct((Mp, Cp), jnp.bfloat16),
        grid_spec=pltpu.PrefetchScalarGridSpec(
            num_scalar_prefetch=0,
            grid=grid,
            in_specs=[pl.BlockSpec((tm, K), lambda j, i: (i, 0)),
                      pl.BlockSpec((K, tn), lambda j, i: (0, j)),
                      pl.BlockSpec((1, tn), lambda j, i: (0, j))],
            out_specs=pl.BlockSpec((tm, tn), lambda j, i: (i, j))),
        compiler_params=pltpu.CompilerParams(
            dimension_semantics=("parallel", "parallel"),
            vmem_limit_bytes=_VMEM_LIMIT),
    )(xp, wp, b2)
    if Mp != M or Cp != C:
        out = out[:M, :C]
    return out


# ---------------------------------------------------------------------------
# 3x3 window prep (shared by conv3x3 and maxpool) — no 9x HBM expansion
# ---------------------------------------------------------------------------
def _prep_taps_3x3(x, stride, pad_val):
    """x (N,H,W,C) -> (xprep (N,Ht,Ws,C), taps [(row_off,col_off)*9], (Ho,Wo)).

    stride 1: xprep is just the spatially padded input (Ht = H+2).
    stride 2: space-to-depth parity decomposition; the 4 parity sub-grids are
    stacked along rows (Ht = 4*(Ho+1)) so every tap is a static stride-1 slice.
    """
    N, H, W, C = x.shape
    Ho = (H - 1) // stride + 1
    Wo = (W - 1) // stride + 1
    xpad = jnp.pad(x, ((0, 0), (1, 1), (1, 1), (0, 0)), constant_values=pad_val)
    if stride == 1:
        taps = [(i, j) for i in range(3) for j in range(3)]
        return xpad, taps, (Ho, Wo)
    assert stride == 2
    Hs, Ws = Ho + 1, Wo + 1
    parts = []
    for rp in range(2):
        for cp in range(2):
            sub = xpad[:, rp::2, cp::2, :][:, :Hs, :Ws, :]
            ph, pw = Hs - sub.shape[1], Ws - sub.shape[2]
            if ph or pw:
                sub = jnp.pad(sub, ((0, 0), (0, ph), (0, pw), (0, 0)),
                              constant_values=pad_val)
            parts.append(sub)
    xprep = jnp.concatenate(parts, axis=1)            # (N, 4*Hs, Ws, C)
    taps = [(((i % 2) * 2 + (j % 2)) * Hs + i // 2, j // 2)
            for i in range(3) for j in range(3)]
    return xprep, taps, (Ho, Wo)


# ---------------------------------------------------------------------------
# Layer wrappers
# ---------------------------------------------------------------------------
def conv3x3_bn_act(x, w, bias, stride=1, residual=None, apply_relu=True):
    """x (N,H,W,Cin_p) NHWC bf16; w (3,3,Cin_p,Cout_p) f32 with BN scale folded."""
    N, H, W, Cin = x.shape
    Cout = w.shape[-1]
    xprep, taps, (Ho, Wo) = _prep_taps_3x3(x.astype(jnp.bfloat16), stride, 0.0)
    _, Ht, Ws, _ = xprep.shape
    wr = w.reshape(9, Cin, Cout).astype(jnp.bfloat16)
    b2 = bias.reshape(1, Cout).astype(jnp.float32)

    in_specs = [pl.BlockSpec((1, Ht, Ws, Cin), lambda n: (n, 0, 0, 0)),
                pl.BlockSpec((9, Cin, Cout), lambda n: (0, 0, 0)),
                pl.BlockSpec((1, Cout), lambda n: (0, 0))]
    args = [xprep, wr, b2]
    if residual is None:
        kern = functools.partial(_conv3x3_kernel, taps=taps, Ho=Ho, Wo=Wo,
                                 apply_relu=apply_relu)
    else:
        kern = functools.partial(_conv3x3_res_kernel, taps=taps, Ho=Ho, Wo=Wo,
                                 apply_relu=apply_relu)
        in_specs.append(pl.BlockSpec((1, Ho, Wo, Cout), lambda n: (n, 0, 0, 0)))
        args.append(residual.astype(jnp.bfloat16))

    return pl.pallas_call(
        kern,
        out_shape=jax.ShapeDtypeStruct((N, Ho, Wo, Cout), jnp.bfloat16),
        grid_spec=pltpu.PrefetchScalarGridSpec(
            num_scalar_prefetch=0,
            grid=(N,),
            in_specs=in_specs,
            out_specs=pl.BlockSpec((1, Ho, Wo, Cout), lambda n: (n, 0, 0, 0))),
        compiler_params=pltpu.CompilerParams(
            dimension_semantics=("parallel",),
            vmem_limit_bytes=_VMEM_LIMIT),
    )(*args)


def conv1x1_bn(x, w, bias, stride=1, apply_relu=False):
    """1x1 conv (downsample path); strided spatial subsample then matmul."""
    if stride != 1:
        x = x[:, ::stride, ::stride, :]
    N, Ho, Wo, Cin = x.shape
    cout = w.shape[-1]
    y = matmul_bias_act(x.reshape(N * Ho * Wo, Cin), w.reshape(Cin, cout),
                        bias, apply_relu=apply_relu)
    return y.reshape(N, Ho, Wo, cout)


def conv_stem_7x1(x, w2d, bias):
    """conv1: (7,1) kernel, stride 1, padding (3,0), Cin=1, Cout padded to 128."""
    # TODO(synk): K=7 / Cin=1 is lane-sparse on the MXU; a dedicated VPU stem
    # kernel fused with the maxpool would remove this near-empty matmul pass.
    N, H, W, Cin = x.shape
    xpad = jnp.pad(x, ((0, 0), (3, 3), (0, 0), (0, 0)))
    taps = [xpad[:, i:i + H, :, :] for i in range(7)]
    patches = jnp.concatenate(taps, axis=-1)          # (N, H, W, 7*Cin)
    y = matmul_bias_act(patches.reshape(N * H * W, 7 * Cin), w2d, bias,
                        apply_relu=True)
    return y.reshape(N, H, W, -1)


def maxpool2d_3x3_s2_p1(x):
    # TODO(synk): self.maxpool is undefined in the PyTorch __init__; the
    # canonical stem pool nn.MaxPool2d(3, stride=2, padding=1) is assumed.
    # Pad value 0 is exact here: the input is post-ReLU (>= 0).
    N, H, W, C = x.shape
    xprep, taps, (Ho, Wo) = _prep_taps_3x3(x, 2, 0.0)
    _, Ht, Ws, _ = xprep.shape
    kern = functools.partial(_maxpool3x3_kernel, taps=taps, Ho=Ho, Wo=Wo)
    return pl.pallas_call(
        kern,
        out_shape=jax.ShapeDtypeStruct((N, Ho, Wo, C), x.dtype),
        grid_spec=pltpu.PrefetchScalarGridSpec(
            num_scalar_prefetch=0,
            grid=(N,),
            in_specs=[pl.BlockSpec((1, Ht, Ws, C), lambda n: (n, 0, 0, 0))],
            out_specs=pl.BlockSpec((1, Ho, Wo, C), lambda n: (n, 0, 0, 0))),
        compiler_params=pltpu.CompilerParams(
            dimension_semantics=("parallel",),
            vmem_limit_bytes=_VMEM_LIMIT),
    )(xprep)


def avgpool_fc(x, fc_w, fc_b):
    """AdaptiveAvgPool2d((1,1)) + flatten + Linear fused in one kernel."""
    N, H, W, C = x.shape
    nc = fc_w.shape[1]
    xr = x.reshape(N, H * W, C)
    return pl.pallas_call(
        _avgpool_fc_kernel,
        out_shape=jax.ShapeDtypeStruct((N, nc), jnp.float32),
        grid_spec=pltpu.PrefetchScalarGridSpec(
            num_scalar_prefetch=0,
            grid=(1,),
            in_specs=[pl.BlockSpec((N, H * W, C), lambda i: (0, 0, 0)),
                      pl.BlockSpec((C, nc), lambda i: (0, 0)),
                      pl.BlockSpec((1, nc), lambda i: (0, 0))],
            out_specs=pl.BlockSpec((N, nc), lambda i: (0, 0))),
        compiler_params=pltpu.CompilerParams(
            dimension_semantics=("arbitrary",),
            vmem_limit_bytes=_VMEM_LIMIT),
    )(xr, fc_w.astype(jnp.float32), fc_b.reshape(1, nc).astype(jnp.float32))


# ---------------------------------------------------------------------------
# Parameters (deterministic, matching the module's __init__ init schemes)
# ---------------------------------------------------------------------------
def _kaiming_conv(key, kh, kw, cin, cout):
    fan_out = kh * kw * cout
    std = (2.0 / fan_out) ** 0.5
    return std * jax.random.normal(key, (kh, kw, cin, cout), jnp.float32)


def _bn_identity(c):
    # gamma=1, beta=0, running_mean=0, running_var=1 (module init / BN defaults).
    return (jnp.ones((c,), jnp.float32), jnp.zeros((c,), jnp.float32),
            jnp.zeros((c,), jnp.float32), jnp.ones((c,), jnp.float32))


def _fold_bn(w, gamma, beta, mean, var):
    scale = gamma / jnp.sqrt(var + BN_EPS)
    return w * scale, beta - mean * scale


def _pad_io(w, b, cin_p, cout_p):
    kh, kw, cin, cout = w.shape
    w = jnp.pad(w, ((0, 0), (0, 0), (0, cin_p - cin), (0, cout_p - cout)))
    b = jnp.pad(b, ((0, cout_p - cout),))
    return w, b


def make_params(key, layers=(1, 1, 1, 1), num_classes=16):
    keys = iter(jax.random.split(key, 64))
    params = {}
    # stem conv1 (1 -> 64), BN scale folded into weights, Cout padded to 128.
    w = _kaiming_conv(next(keys), 7, 1, 1, 64)
    wf, bf = _fold_bn(w, *_bn_identity(64))
    wf, bf = _pad_io(wf, bf, 1, _cphys(64))
    params["stem_w"] = wf.reshape(7, _cphys(64))
    params["stem_b"] = bf

    inplanes = 64
    stage_planes = [64, 128, 256, 512]
    stage_strides = [1, 2, 2, 2]
    stages = []
    for si in range(4):
        planes = stage_planes[si]
        stage = []
        for bi in range(layers[si]):
            stride = stage_strides[si] if bi == 0 else 1
            cin_p, cout_p = _cphys(inplanes), _cphys(planes)
            blk = {"stride": stride}
            w1 = _kaiming_conv(next(keys), 3, 3, inplanes, planes)
            w1, b1 = _fold_bn(w1, *_bn_identity(planes))
            blk["conv1_w"], blk["conv1_b"] = _pad_io(w1, b1, cin_p, cout_p)
            w2 = _kaiming_conv(next(keys), 3, 3, planes, planes)
            w2, b2 = _fold_bn(w2, *_bn_identity(planes))
            blk["conv2_w"], blk["conv2_b"] = _pad_io(w2, b2, cout_p, cout_p)
            if stride != 1 or inplanes != planes:
                wd = _kaiming_conv(next(keys), 1, 1, inplanes, planes)
                wd, bd = _fold_bn(wd, *_bn_identity(planes))
                blk["down_w"], blk["down_b"] = _pad_io(wd, bd, cin_p, cout_p)
            stage.append(blk)
            inplanes = planes
        stages.append(stage)
    params["stages"] = stages

    # nn.Linear default init: U(-1/sqrt(fan_in), 1/sqrt(fan_in)); fan_in = 256*expansion
    fan_in = 256
    k = 1.0 / (fan_in ** 0.5)
    params["fc_w"] = jax.random.uniform(next(keys), (fan_in, num_classes),
                                        jnp.float32, -k, k)
    params["fc_b"] = jax.random.uniform(next(keys), (num_classes,),
                                        jnp.float32, -k, k)
    return params


# ---------------------------------------------------------------------------
# Forward pass (mirrors ResNetStockZT.forward)
# ---------------------------------------------------------------------------
def _basic_block(x, blk):
    stride = blk["stride"]
    out = conv3x3_bn_act(x, blk["conv1_w"], blk["conv1_b"], stride=stride,
                         apply_relu=True)
    if "down_w" in blk:
        identity = conv1x1_bn(x, blk["down_w"], blk["down_b"], stride=stride,
                              apply_relu=False)
    else:
        identity = x
    # conv2 + bn2 + residual add + final ReLU fused in one kernel
    out = conv3x3_bn_act(out, blk["conv2_w"], blk["conv2_b"], stride=1,
                         residual=identity, apply_relu=True)
    return out


def resnet_stock_zt_forward(params, x_nchw):
    x = jnp.transpose(x_nchw, (0, 2, 3, 1))          # NCHW -> NHWC
    x = conv_stem_7x1(x, params["stem_w"], params["stem_b"])
    x = maxpool2d_3x3_s2_p1(x)
    # layer1, layer2, layer3 (layer4 is built by the module but never called)
    for stage in params["stages"][:3]:
        for blk in stage:
            x = _basic_block(x, blk)
    # layer3 output is exactly 256 channels (no padding) -> avgpool + fc fused
    return avgpool_fc(x, params["fc_w"], params["fc_b"])


if __name__ == "__main__":
    key = jax.random.PRNGKey(0)
    pkey, xkey = jax.random.split(key)
    num_classes = 16
    params = make_params(pkey, layers=(1, 1, 1, 1), num_classes=num_classes)
    # module's conv1 expects a single input channel: NCHW (batch=2, 1, H=16, W=8)
    x = jax.random.normal(xkey, (2, 1, 16, 8), jnp.float32)
    out = resnet_stock_zt_forward(params, x)
    out = jax.block_until_ready(out)
    assert out.shape == (2, num_classes), out.shape
    assert bool(jnp.all(jnp.isfinite(out)))
    print("KERNEL_OK")
</pallas_src>

<mosaic_0001>
module attributes {stable_mosaic.version = 11 : i64} {
  func.func @_mm_bias_kernel(%arg0: i32, %arg1: i32, %arg2: memref<256x7xbf16, #tpu.memory_space<vmem>>, %arg3: memref<7x128xbf16, #tpu.memory_space<vmem>>, %arg4: memref<1x128xf32, #tpu.memory_space<vmem>>, %arg5: memref<256x128xbf16, #tpu.memory_space<vmem>>) attributes {dimension_semantics = [#tpu.dimension_semantics<parallel>, #tpu.dimension_semantics<parallel>], iteration_bounds = array<i64: 1, 1>, scalar_prefetch = 0 : i64, scratch_operands = 0 : i64, tpu.core_type = #tpu.core_type<tc>, window_params = [{transform_indices = @transform_0, window_bounds = array<i64: 256, 7>}, {transform_indices = @transform_1, window_bounds = array<i64: 7, 128>}, {transform_indices = @transform_2, window_bounds = array<i64: 1, 128>}, {transform_indices = @transform_3, window_bounds = array<i64: 256, 128>}]} {
    %c0 = arith.constant 0 : index
    %c0_0 = arith.constant 0 : index
    %0 = vector.load %arg2[%c0, %c0_0] : memref<256x7xbf16, #tpu.memory_space<vmem>>, vector<256x7xbf16>
    %c0_1 = arith.constant 0 : index
    %c0_2 = arith.constant 0 : index
    %1 = vector.load %arg3[%c0_1, %c0_2] : memref<7x128xbf16, #tpu.memory_space<vmem>>, vector<7x128xbf16>
    %cst = arith.constant dense<0.000000e+00> : vector<256x128xf32>
    %2 = tpu.matmul %0, %1, %cst {dimension_numbers = #tpu.dot_dimension_numbers<[1], [0], [0], [1], [0, 0, 1, 1], [], []>} : vector<256x7xbf16>, vector<7x128xbf16>, vector<256x128xf32> -> vector<256x128xf32>
    %c0_3 = arith.constant 0 : index
    %c0_4 = arith.constant 0 : index
    %3 = vector.load %arg4[%c0_3, %c0_4] : memref<1x128xf32, #tpu.memory_space<vmem>>, vector<1x128xf32>
    %4 = vector.broadcast %3 : vector<1x128xf32> to vector<256x128xf32>
    %5 = arith.addf %2, %4 : vector<256x128xf32>
    %cst_5 = arith.constant 0.000000e+00 : f32
    %6 = vector.broadcast %cst_5 : f32 to vector<256x128xf32>
    %7 = arith.maximumf %5, %6 : vector<256x128xf32>
    %8 = arith.truncf %7 : vector<256x128xf32> to vector<256x128xbf16>
    %c0_6 = arith.constant 0 : index
    %c0_7 = arith.constant 0 : index
    %9 = vector.load %arg5[%c0_6, %c0_7] : memref<256x128xbf16, #tpu.memory_space<vmem>>, vector<256x128xbf16>
    tpu.vector_store %arg5[%c0_6, %c0_7], %8 {strides = array<i32>} : memref<256x128xbf16, #tpu.memory_space<vmem>>, vector<256x128xbf16>,
    return
  }
  func.func @transform_0(%arg0: i32, %arg1: i32) -> (i32, i32) {
    %c0_i32 = arith.constant 0 : i32
    %c0_i32_0 = arith.constant 0 : i32
    return %arg1, %c0_i32 : i32, i32
  }
  func.func @transform_1(%arg0: i32, %arg1: i32) -> (i32, i32) {
    %c0_i32 = arith.constant 0 : i32
    %c0_i32_0 = arith.constant 0 : i32
    return %c0_i32, %arg0 : i32, i32
  }
  func.func @transform_2(%arg0: i32, %arg1: i32) -> (i32, i32) {
    %c0_i32 = arith.constant 0 : i32
    %c0_i32_0 = arith.constant 0 : i32
    return %c0_i32, %arg0 : i32, i32
  }
  func.func @transform_3(%arg0: i32, %arg1: i32) -> (i32, i32) {
    %c0_i32 = arith.constant 0 : i32
    return %arg1, %arg0 : i32, i32
  }
}

</mosaic_0001>

<llo_original>
// kernel: tpu_custom_call.1
$region0: #{tpu_custom_call.1}
  #allocation0 [shape = 'u32[]', space=smem, size = 0x4, offset = 0x4, fixed_abs, tag = 'smem constant byte address 0x4 - core index']
  #allocation1 [shape = 'u32[72,128]{1,0:T(1,128)}', space=vmem, size = 0x9000, scoped, tag = 'internal scratch']
  %s0 = inlined_call_operand.vmem [shape: bf16[256,7], index: 0, kind: input, shape index: {}]
  %s1 = inlined_call_operand.vmem [shape: bf16[7,128], index: 1, kind: input, shape index: {}]
  %s2 = inlined_call_operand.vmem [shape: f32[1,128], index: 2, kind: input, shape index: {}]
  %s3 = inlined_call_operand.hbm [shape: bf16[256,128], index: 3, kind: output, shape index: {}]
  %s4 = sld [smem:[#allocation0]]
  $region22: #{tpu_custom_call.1} parent=0
    _
  %s6 = ssub.s32 1, %s4
  %s7 = scalar_select 0, %s6, %s4
  $region1: #{tpu_custom_call.1} parent=0
    #allocation2 [shape = 'u8[65536]{0}', space=vmem, size = 0x10000, scoped, tag = 'output window, operand 0, single buffered']
    #allocation3 [shape = 's32[1]{0}', space=sflag, size = 0x4, scoped, tag = 'scoped memory for tpu_custom_call.1']
    %8 = vsyncpa [#allocation3], 0
    // Predicated region
    $region2: #{tpu_custom_call.1} parent=1 // pred_check
      _
    $region3: #{tpu_custom_call.1} parent=1 // pred_check_branch
      %10 = sbr.rel (0) target = $region5
    $region4: #{tpu_custom_call.1} parent=1 // pred_region
      _
    $region5: #{tpu_custom_call.1} parent=1 // pred_fallthru
      _
    // Predicated region
    $region6: #{tpu_custom_call.1} parent=1 // pred_check
      _
    $region7: #{tpu_custom_call.1} parent=1 // pred_check_branch
      %12 = sbr.rel (0) target = $region9
    $region8: #{tpu_custom_call.1} parent=1 // pred_region
      _
    $region9: #{tpu_custom_call.1} parent=1 // pred_fallthru
      _
    // Predicated region
    $region10: #{tpu_custom_call.1} parent=1 // pred_check
      _
    $region11: #{tpu_custom_call.1} parent=1 // pred_check_branch
      %14 = sbr.rel (0) target = $region13
    $region12: #{tpu_custom_call.1} parent=1 // pred_region
      _
    $region13: #{tpu_custom_call.1} parent=1 // pred_fallthru
      _
    %v16 = vld [vmem:[%s0] sm:$0xf]
    %v17 = vld [vmem:[%s0 + $0x4] sm:$0xf]
    %v18 = vld [vmem:[%s0 + $0x8] sm:$0xf]
    %v19 = vld [vmem:[%s0 + $0xc] sm:$0xf]
    %v20 = vld [vmem:[%s0 + $0x10] sm:$0xf]
    %v21 = vld [vmem:[%s0 + $0x14] sm:$0xf]
    %v22 = vld [vmem:[%s0 + $0x18] sm:$0xf]
    %v23 = vld [vmem:[%s0 + $0x1c] sm:$0xf]
    %v24 = vld [vmem:[%s0 + $0x20] sm:$0xf]
    %v25 = vld [vmem:[%s0 + $0x24] sm:$0xf]
    %v26 = vld [vmem:[%s0 + $0x28] sm:$0xf]
    %v27 = vld [vmem:[%s0 + $0x2c] sm:$0xf]
    %v28 = vld [vmem:[%s0 + $0x30] sm:$0xf]
    %v29 = vld [vmem:[%s0 + $0x34] sm:$0xf]
    %v30 = vld [vmem:[%s0 + $0x38] sm:$0xf]
    %v31 = vld [vmem:[%s0 + $0x3c] sm:$0xf]
    %v32 = vld [vmem:[%s0 + $0x40] sm:$0xf]
    %v33 = vld [vmem:[%s0 + $0x44] sm:$0xf]
    %v34 = vld [vmem:[%s0 + $0x48] sm:$0xf]
    %v35 = vld [vmem:[%s0 + $0x4c] sm:$0xf]
    %v36 = vld [vmem:[%s0 + $0x50] sm:$0xf]
    %v37 = vld [vmem:[%s0 + $0x54] sm:$0xf]
    %v38 = vld [vmem:[%s0 + $0x58] sm:$0xf]
    %v39 = vld [vmem:[%s0 + $0x5c] sm:$0xf]
    %v40 = vld [vmem:[%s0 + $0x60] sm:$0xf]
    %v41 = vld [vmem:[%s0 + $0x64] sm:$0xf]
    %v42 = vld [vmem:[%s0 + $0x68] sm:$0xf]
    %v43 = vld [vmem:[%s0 + $0x6c] sm:$0xf]
    %v44 = vld [vmem:[%s0 + $0x70] sm:$0xf]
    %v45 = vld [vmem:[%s0 + $0x74] sm:$0xf]
    %v46 = vld [vmem:[%s0 + $0x78] sm:$0xf]
    %v47 = vld [vmem:[%s0 + $0x7c] sm:$0xf]
    %v48 = vld [vmem:[%s1] sm:$0xf]
    %v49 = vld [vmem:[%s2] sm:$0x1]
    %v51 = vperm.slane %v49, 0
    %v85 = vunpack.c.l.b16 %v16
    %v86 = vunpack.c.l.b16 %v17
    %v87 = vunpack.c.l.b16 %v18
    %v88 = vunpack.c.l.b16 %v19
    %v89 = vunpack.c.l.b16 %v20
    %v90 = vunpack.c.l.b16 %v21
    %v91 = vunpack.c.l.b16 %v22
    %v92 = vunpack.c.l.b16 %v23
    %v93 = vunpack.c.l.b16 %v24
    %v94 = vunpack.c.l.b16 %v25
    %v95 = vunpack.c.l.b16 %v26
    %v96 = vunpack.c.l.b16 %v27
    %v97 = vunpack.c.l.b16 %v28
    %v98 = vunpack.c.l.b16 %v29
    %v99 = vunpack.c.l.b16 %v30
    %v100 = vunpack.c.l.b16 %v31
    %v101 = vunpack.c.l.b16 %v32
    %v102 = vunpack.c.l.b16 %v33
    %v103 = vunpack.c.l.b16 %v34
    %v104 = vunpack.c.l.b16 %v35
    %v105 = vunpack.c.l.b16 %v36
    %v106 = vunpack.c.l.b16 %v37
    %v107 = vunpack.c.l.b16 %v38
    %v108 = vunpack.c.l.b16 %v39
    %v109 = vunpack.c.l.b16 %v40
    %v110 = vunpack.c.l.b16 %v41
    %v111 = vunpack.c.l.b16 %v42
    %v112 = vunpack.c.l.b16 %v43
    %v113 = vunpack.c.l.b16 %v44
    %v114 = vunpack.c.l.b16 %v45
    %v115 = vunpack.c.l.b16 %v46
    %v116 = vunpack.c.l.b16 %v47
    %v117 = vpack.c.b16 %v86, %v85
    %v118 = vpack.c.b16 %v88, %v87
    %v119 = vpack.c.b16 %v90, %v89
    %v120 = vpack.c.b16 %v92, %v91
    %v121 = vpack.c.b16 %v94, %v93
    %v122 = vpack.c.b16 %v96, %v95
    %v123 = vpack.c.b16 %v98, %v97
    %v124 = vpack.c.b16 %v100, %v99
    %v125 = vpack.c.b16 %v102, %v101
    %v126 = vpack.c.b16 %v104, %v103
    %v127 = vpack.c.b16 %v106, %v105
    %v128 = vpack.c.b16 %v108, %v107
    %v129 = vpack.c.b16 %v110, %v109
    %v130 = vpack.c.b16 %v112, %v111
    %v131 = vpack.c.b16 %v114, %v113
    %v132 = vpack.c.b16 %v116, %v115
    %vm133 = vcmask 56320
    %v135 = vsel %vm133, %v117, 0
    %v138 = vsel %vm133, %v118, 0
    %v141 = vsel %vm133, %v119, 0
    %v144 = vsel %vm133, %v120, 0
    %v147 = vsel %vm133, %v121, 0
    %v150 = vsel %vm133, %v122, 0
    %v153 = vsel %vm133, %v123, 0
    %v156 = vsel %vm133, %v124, 0
    %v159 = vsel %vm133, %v125, 0
    %v162 = vsel %vm133, %v126, 0
    %v165 = vsel %vm133, %v127, 0
    %v168 = vsel %vm133, %v128, 0
    %v171 = vsel %vm133, %v129, 0
    %v174 = vsel %vm133, %v130, 0
    %v177 = vsel %vm133, %v131, 0
    %v180 = vsel %vm133, %v132, 0
    %vm182 = vcmask 1042432
    %vm183 = vcmask 1043456
    %v184 = vsel %vm182, 4294967295, 65535
    %v185 = vsel %vm183, %v184, 0
    %v187 = vand.u32 %v48, %v185
    %189 = vmatpush.bf16.msra.mxu0 0
    %190 = vmatpush.bf16.msra.mxu0 0
    %191 = vmatpush.bf16.msra.mxu0 0
    %192 = vmatpush.bf16.msra.mxu0 0
    %193 = vmatpush.bf16.msra.mxu0 0
    %194 = vmatpush.bf16.msra.mxu0 0
    %195 = vmatpush.bf16.msra.mxu0 0
    %196 = vmatpush.bf16.msra.mxu0 %v187
    %197 = vmatmul.bf16.gmra.mxu0 %v135
    %v198 = vpop.f32.mrf.mxu0
    %v199 = vadd.f32 %v51, %v198
    %v200 = vpop.f32.mrf.mxu0
    %v201 = vadd.f32 %v51, %v200
    %202 = vmatmul.bf16.gmra.mxu0 %v138
    %v203 = vpop.f32.mrf.mxu0
    %v204 = vadd.f32 %v51, %v203
    %v205 = vpop.f32.mrf.mxu0
    %v206 = vadd.f32 %v51, %v205
    %207 = vmatmul.bf16.gmra.mxu0 %v141
    %v208 = vpop.f32.mrf.mxu0
    %v209 = vadd.f32 %v51, %v208
    %v210 = vpop.f32.mrf.mxu0
    %v211 = vadd.f32 %v51, %v210
    %212 = vmatmul.bf16.gmra.mxu0 %v144
    %v213 = vpop.f32.mrf.mxu0
    %v214 = vadd.f32 %v51, %v213
    %v215 = vpop.f32.mrf.mxu0
    %v216 = vadd.f32 %v51, %v215
    %217 = vmatmul.bf16.gmra.mxu0 %v147
    %v218 = vpop.f32.mrf.mxu0
    %v219 = vadd.f32 %v51, %v218
    %v220 = vpop.f32.mrf.mxu0
    %v221 = vadd.f32 %v51, %v220
    %222 = vmatmul.bf16.gmra.mxu0 %v150
    %v223 = vpop.f32.mrf.mxu0
    %v224 = vadd.f32 %v51, %v223
    %v225 = vpop.f32.mrf.mxu0
    %v226 = vadd.f32 %v51, %v225
    %227 = vmatmul.bf16.gmra.mxu0 %v153
    %v228 = vpop.f32.mrf.mxu0
    %v229 = vadd.f32 %v51, %v228
    %v230 = vpop.f32.mrf.mxu0
    %v231 = vadd.f32 %v51, %v230
    %232 = vmatmul.bf16.gmra.mxu0 %v156
    %v233 = vpop.f32.mrf.mxu0
    %v234 = vadd.f32 %v51, %v233
    %v235 = vpop.f32.mrf.mxu0
    %v236 = vadd.f32 %v51, %v235
    %237 = vmatmul.bf16.gmra.mxu0 %v159
    %v238 = vpop.f32.mrf.mxu0
    %v239 = vadd.f32 %v51, %v238
    %v240 = vpop.f32.mrf.mxu0
    %v241 = vadd.f32 %v51, %v240
    %242 = vmatmul.bf16.gmra.mxu0 %v162
    %v243 = vpop.f32.mrf.mxu0
    %v244 = vadd.f32 %v51, %v243
    %v245 = vpop.f32.mrf.mxu0
    %v246 = vadd.f32 %v51, %v245
    %247 = vmatmul.bf16.gmra.mxu0 %v165
    %v248 = vpop.f32.mrf.mxu0
    %v249 = vadd.f32 %v51, %v248
    %v250 = vpop.f32.mrf.mxu0
    %v251 = vadd.f32 %v51, %v250
    %252 = vmatmul.bf16.gmra.mxu0 %v168
    %v253 = vpop.f32.mrf.mxu0
    %v254 = vadd.f32 %v51, %v253
    %v255 = vpop.f32.mrf.mxu0
    %v256 = vadd.f32 %v51, %v255
    %257 = vmatmul.bf16.gmra.mxu0 %v171
    %v258 = vpop.f32.mrf.mxu0
    %v259 = vadd.f32 %v51, %v258
    %v260 = vpop.f32.mrf.mxu0
    %v261 = vadd.f32 %v51, %v260
    %262 = vmatmul.bf16.gmra.mxu0 %v174
    %v263 = vpop.f32.mrf.mxu0
    %v264 = vadd.f32 %v51, %v263
    %v265 = vpop.f32.mrf.mxu0
    %v266 = vadd.f32 %v51, %v265
    %267 = vmatmul.bf16.gmra.mxu0 %v177
    %v268 = vpop.f32.mrf.mxu0
    %v269 = vadd.f32 %v51, %v268
    %v270 = vpop.f32.mrf.mxu0
    %v271 = vadd.f32 %v51, %v270
    %272 = vmatmul.bf16.gmra.mxu0 %v180
    %v273 = vpop.f32.mrf.mxu0
    %v274 = vadd.f32 %v51, %v273
    %v275 = vpop.f32.mrf.mxu0
    %v276 = vadd.f32 %v51, %v275
    %277 = vdwg.mxu0
    %v278 = vmax.f32 %v199, 0.0
    %v279 = vmax.f32 %v201, 0.0
    %v280 = vmax.f32 %v204, 0.0
    %v281 = vmax.f32 %v206, 0.0
    %v282 = vmax.f32 %v209, 0.0
    %v283 = vmax.f32 %v211, 0.0
    %v284 = vmax.f32 %v214, 0.0
    %v285 = vmax.f32 %v216, 0.0
    %v286 = vmax.f32 %v219, 0.0
    %v287 = vmax.f32 %v221, 0.0
    %v288 = vmax.f32 %v224, 0.0
    %v289 = vmax.f32 %v226, 0.0
    %v290 = vmax.f32 %v229, 0.0
    %v291 = vmax.f32 %v231, 0.0
    %v292 = vmax.f32 %v234, 0.0
    %v293 = vmax.f32 %v236, 0.0
    %v294 = vmax.f32 %v239, 0.0
    %v295 = vmax.f32 %v241, 0.0
    %v296 = vmax.f32 %v244, 0.0
    %v297 = vmax.f32 %v246, 0.0
    %v298 = vmax.f32 %v249, 0.0
    %v299 = vmax.f32 %v251, 0.0
    %v300 = vmax.f32 %v254, 0.0
    %v301 = vmax.f32 %v256, 0.0
    %v302 = vmax.f32 %v259, 0.0
    %v303 = vmax.f32 %v261, 0.0
    %v304 = vmax.f32 %v264, 0.0
    %v305 = vmax.f32 %v266, 0.0
    %v306 = vmax.f32 %v269, 0.0
    %v307 = vmax.f32 %v271, 0.0
    %v308 = vmax.f32 %v274, 0.0
    %v309 = vmax.f32 %v276, 0.0
    %v310 = vpack.c.bf16 %v278, %v278
    %v311 = vpack.c.bf16 %v279, %v279
    %v312 = vpack.c.bf16 %v280, %v280
    %v313 = vpack.c.bf16 %v281, %v281
    %v314 = vpack.c.bf16 %v282, %v282
    %v315 = vpack.c.bf16 %v283, %v283
    %v316 = vpack.c.bf16 %v284, %v284
    %v317 = vpack.c.bf16 %v285, %v285
    %v318 = vpack.c.bf16 %v286, %v286
    %v319 = vpack.c.bf16 %v287, %v287
    %v320 = vpack.c.bf16 %v288, %v288
    %v321 = vpack.c.bf16 %v289, %v289
    %v322 = vpack.c.bf16 %v290, %v290
    %v323 = vpack.c.bf16 %v291, %v291
    %v324 = vpack.c.bf16 %v292, %v292
    %v325 = vpack.c.bf16 %v293, %v293
    %v326 = vpack.c.bf16 %v294, %v294
    %v327 = vpack.c.bf16 %v295, %v295
    %v328 = vpack.c.bf16 %v296, %v296
    %v329 = vpack.c.bf16 %v297, %v297
    %v330 = vpack.c.bf16 %v298, %v298
    %v331 = vpack.c.bf16 %v299, %v299
    %v332 = vpack.c.bf16 %v300, %v300
    %v333 = vpack.c.bf16 %v301, %v301
    %v334 = vpack.c.bf16 %v302, %v302
    %v335 = vpack.c.bf16 %v303, %v303
    %v336 = vpack.c.bf16 %v304, %v304
    %v337 = vpack.c.bf16 %v305, %v305
    %v338 = vpack.c.bf16 %v306, %v306
    %v339 = vpack.c.bf16 %v307, %v307
    %v340 = vpack.c.bf16 %v308, %v308
    %v341 = vpack.c.bf16 %v309, %v309
    %342 = vst [vmem:[#allocation2] sm:$0xf] %v310
    %343 = vst [vmem:[#allocation2 + $0x4] sm:$0xf] %v311
    %344 = vst [vmem:[#allocation2 + $0x8] sm:$0xf] %v312
    %345 = vst [vmem:[#allocation2 + $0xc] sm:$0xf] %v313
    %346 = vst [vmem:[#allocation2 + $0x10] sm:$0xf] %v314
    %347 = vst [vmem:[#allocation2 + $0x14] sm:$0xf] %v315
    %348 = vst [vmem:[#allocation2 + $0x18] sm:$0xf] %v316
    %349 = vst [vmem:[#allocation2 + $0x1c] sm:$0xf] %v317
    %350 = vst [vmem:[#allocation2 + $0x20] sm:$0xf] %v318
    %351 = vst [vmem:[#allocation2 + $0x24] sm:$0xf] %v319
    %352 = vst [vmem:[#allocation2 + $0x28] sm:$0xf] %v320
    %353 = vst [vmem:[#allocation2 + $0x2c] sm:$0xf] %v321
    %354 = vst [vmem:[#allocation2 + $0x30] sm:$0xf] %v322
    %355 = vst [vmem:[#allocation2 + $0x34] sm:$0xf] %v323
    %356 = vst [vmem:[#allocation2 + $0x38] sm:$0xf] %v324
    %357 = vst [vmem:[#allocation2 + $0x3c] sm:$0xf] %v325
    %358 = vst [vmem:[#allocation2 + $0x40] sm:$0xf] %v326
    %359 = vst [vmem:[#allocation2 + $0x44] sm:$0xf] %v327
    %360 = vst [vmem:[#allocation2 + $0x48] sm:$0xf] %v328
    %361 = vst [vmem:[#allocation2 + $0x4c] sm:$0xf] %v329
    %362 = vst [vmem:[#allocation2 + $0x50] sm:$0xf] %v330
    %363 = vst [vmem:[#allocation2 + $0x54] sm:$0xf] %v331
    %364 = vst [vmem:[#allocation2 + $0x58] sm:$0xf] %v332
    %365 = vst [vmem:[#allocation2 + $0x5c] sm:$0xf] %v333
    %366 = vst [vmem:[#allocation2 + $0x60] sm:$0xf] %v334
    %367 = vst [vmem:[#allocation2 + $0x64] sm:$0xf] %v335
    %368 = vst [vmem:[#allocation2 + $0x68] sm:$0xf] %v336
    %369 = vst [vmem:[#allocation2 + $0x6c] sm:$0xf] %v337
    %370 = vst [vmem:[#allocation2 + $0x70] sm:$0xf] %v338
    %371 = vst [vmem:[#allocation2 + $0x74] sm:$0xf] %v339
    %372 = vst [vmem:[#allocation2 + $0x78] sm:$0xf] %v340
    %373 = vst [vmem:[#allocation2 + $0x7c] sm:$0xf] %v341
    // Predicated region
    $region14: #{tpu_custom_call.1} parent=1 // pred_check
      _
    $region15: #{tpu_custom_call.1} parent=1 // pred_check_branch
      %375 = sbr.rel (0) target = $region17
    $region16: #{tpu_custom_call.1} parent=1 // pred_region
      %377 = vsyncadd [#allocation3], 0
      %s378 = sshll.u32 [#allocation2], 4
      %s379 = int_to_ptr.vmem [resolvable:$true] %s378
      %s380 = sshll.u32 %s3, 4
      %s381 = int_to_ptr.hbm [resolvable:$true] %s380
      %386 = dma.vmem_to_hbm [thread:$0]  %s379, 2048, %s381, [#allocation3], 64, 64, 4
    $region17: #{tpu_custom_call.1} parent=1 // pred_fallthru
      _
    // Predicated region
    $region18: #{tpu_custom_call.1} parent=1 // pred_check
      _
    $region19: #{tpu_custom_call.1} parent=1 // pred_check_branch
      %388 = sbr.rel (0) target = $region21
    $region20: #{tpu_custom_call.1} parent=1 // pred_region
      %390 = dma.done [#allocation3], 2048
    $region21: #{tpu_custom_call.1} parent=1 // pred_fallthru
      _
    %391 = vsyncpa [#allocation3], 1

</llo_original>
